<compile_context>
chip_gen: v5e
topology: v5e:2x2
jax: 0.10.0
libtpu: 0.0.40
codegen_flags: <defaults>
</compile_context>

<pallas_src>
import functools

import jax
import jax.numpy as jnp
from jax.experimental import pallas as pl
from jax.experimental.pallas import tpu as pltpu


def _round_up(a, b):
    return (a + b - 1) // b * b


def _tpu_generation():
    try:
        kind = jax.devices()[0].device_kind.lower()
    except Exception:
        return "unknown"
    if "7" in kind:
        return "v7x"
    if "v6" in kind or "6e" in kind:
        return "v6e"
    if "v5" in kind or "5 lite" in kind:
        return "v5e"
    return "unknown"


def _vmem_capacity_bytes(gen):
    try:
        return int(pltpu.get_tpu_info().vmem_capacity_bytes)
    except Exception:
        # Conservative fallbacks: 64 MiB per TC on v7x / unknown, 128 MiB else.
        return (64 << 20) if gen in ("v7x", "unknown") else (128 << 20)


def _weight_block_bytes(D, th, tm, w_isz, h_isz):
    # w1 (D, th) + w2 (th, D) + b1 (sublane-padded to 8, th), double-buffered,
    # plus the (tm, th) hidden intermediate Mosaic materializes in VMEM.
    return 2 * (2 * D * th + 8 * th) * w_isz + tm * th * h_isz


def _non_weight_bytes(tm, D, x_isz, o_isz):
    # x / out blocks (double-buffered) + f32 accumulator scratch (worst case)
    # + [b2; gamma; beta] f32 block (sublane-padded, double-buffered).
    return 2 * tm * D * x_isz + 2 * tm * D * o_isz + tm * D * 4 + 2 * 8 * D * 4


def _pick_hidden_tile(D, H, tm, w_isz, h_isz, budget, prefer_align):
    """Returns (th, Hp). th == Hp means a single fully-resident hidden block."""
    if _weight_block_bytes(D, H, tm, w_isz, h_isz) <= budget:
        return H, H
    # Streamed: prefer clean divisors of H (256-aligned on v6e/v7x, else 128).
    aligns = (prefer_align, 128) if prefer_align != 128 else (128,)
    for align in aligns:
        divs = [t for t in range(align, H, align)
                if H % t == 0 and _weight_block_bytes(D, t, tm, w_isz, h_isz) <= budget]
        if divs:
            return max(divs), H
    # No clean divisor fits: zero-pad the hidden axis up to a multiple of th
    # (padded columns/rows are inert through ReLU and the second matmul).
    th = 128
    for cand in range(128, _round_up(H, 128) + 1, 128):
        if _weight_block_bytes(D, cand, tm, w_isz, h_isz) <= budget:
            th = cand
        else:
            break
    return th, _round_up(H, th)


def _bias_layernorm(y_f32, lnp, eps, out_dtype):
    b2 = lnp[0:1, :]
    gamma = lnp[1:2, :]
    beta = lnp[2:3, :]
    y = y_f32 + b2
    # dropout(p=0.0) is the identity -> nothing to do.
    mean = jnp.mean(y, axis=-1, keepdims=True)
    var = jnp.mean((y - mean) * (y - mean), axis=-1, keepdims=True)
    y_hat = (y - mean) * jax.lax.rsqrt(var + eps)
    return (y_hat * gamma + beta).astype(out_dtype)


def _ffn_ln_resident_kernel(x_ref, w1_ref, b1_ref, w2_ref, lnp_ref, o_ref, *,
                            eps, h_dtype):
    """Fast path: whole hidden dim resident (1-D row grid, no accumulator)."""
    h = jnp.dot(x_ref[...], w1_ref[...], preferred_element_type=h_dtype)
    h = jnp.maximum(h + b1_ref[...].astype(h_dtype), 0.0)
    y = jnp.dot(h.astype(w2_ref.dtype), w2_ref[...],
                preferred_element_type=jnp.float32)
    o_ref[...] = _bias_layernorm(y, lnp_ref[...], eps, o_ref.dtype)


def _ffn_ln_streamed_kernel(x_ref, w1_ref, b1_ref, w2_ref, lnp_ref, o_ref,
                            acc_ref, *, eps, h_dtype):
    """Streamed path: grid = (row tiles, hidden tiles); hidden is a reduction."""
    hj = pl.program_id(1)

    @pl.when(hj == 0)
    def _init():
        acc_ref[...] = jnp.zeros_like(acc_ref)

    h = jnp.dot(x_ref[...], w1_ref[...], preferred_element_type=h_dtype)
    h = jnp.maximum(h + b1_ref[...].astype(h_dtype), 0.0)
    acc_ref[...] += jnp.dot(h.astype(w2_ref.dtype), w2_ref[...],
                            preferred_element_type=jnp.float32)

    @pl.when(hj == pl.num_programs(1) - 1)
    def _finalize():
        o_ref[...] = _bias_layernorm(acc_ref[...], lnp_ref[...], eps, o_ref.dtype)


_DEFAULT_ROW_TILE = {"v5e": 256, "v6e": 768, "v7x": 512}


def position_wise_feed_forward(x, w1, b1, w2, b2, gamma, beta, *, eps=1e-5,
                               compute_dtype=None, row_tile=None,
                               hidden_tile=None):
    """x: (B, S, D). Returns (B, S, D).

    compute_dtype: optional dtype (e.g. jnp.bfloat16) for the MXU operands
      (x / w1 / b1 / w2); accumulation and LayerNorm stay f32. bf16 operands
      get full MXU rate and halve weight/activation HBM bytes. Default (None)
      keeps the caller's dtype (faithful to the PyTorch f32 numerics).
    """
    B, S, D = x.shape
    H = w1.shape[1]
    rows = B * S
    gen = _tpu_generation()

    if compute_dtype is not None:
        x = x.astype(compute_dtype)
        w1 = w1.astype(compute_dtype)
        b1 = b1.astype(compute_dtype)
        w2 = w2.astype(compute_dtype)

    op_dtype = x.dtype
    o_dtype = op_dtype
    x_isz = jnp.dtype(op_dtype).itemsize
    o_isz = jnp.dtype(o_dtype).itemsize
    w_isz = jnp.dtype(w1.dtype).itemsize

    # bf16 intermediate activations only where the VPU has bf16 (v6e/v7x);
    # v5e keeps f32 elementwise math.
    if op_dtype == jnp.bfloat16 and gen in ("v6e", "v7x"):
        h_dtype = jnp.bfloat16
    else:
        h_dtype = jnp.float32
    h_isz = jnp.dtype(h_dtype).itemsize

    vmem_cap = _vmem_capacity_bytes(gen)
    usable = vmem_cap - (8 << 20)

    # ---- Row tile ---------------------------------------------------------
    # Big row tiles raise arithmetic intensity (~tm FLOPs per weight byte) so
    # streamed weights are not re-fetched too often; shrunk for tiny inputs.
    tm = row_tile if row_tile is not None else _DEFAULT_ROW_TILE.get(gen, 256)
    tm = min(tm, _round_up(rows, 8))
    tm = max(8, (tm // 8) * 8)
    if row_tile is None and gen == "v7x" and rows > 8:
        # Make sure both v7x TensorCores get row tiles ("parallel" axis).
        if _round_up(rows, tm) // tm < 2:
            tm = max(8, _round_up((rows + 1) // 2, 8))

    # ---- Hidden tile ------------------------------------------------------
    prefer_align = 256 if gen in ("v6e", "v7x") else 128
    if hidden_tile is not None:
        if hidden_tile >= H:
            th, Hp = H, H
        else:
            th = max(128, _round_up(hidden_tile, 128))
            Hp = _round_up(H, th)
    else:
        while True:
            budget = usable - _non_weight_bytes(tm, D, x_isz, o_isz)
            if gen != "v7x":
                # 128 MiB chips: up to ~64 MiB of weight blocks stays resident.
                budget = min(budget, 64 << 20)
            th, Hp = _pick_hidden_tile(D, H, tm, w_isz, h_isz, budget, prefer_align)
            fits = (_weight_block_bytes(D, th, tm, w_isz, h_isz)
                    + _non_weight_bytes(tm, D, x_isz, o_isz)) <= usable
            if fits or tm <= 8:
                break
            tm = max(8, ((tm // 2) // 8) * 8)   # shrink rows only as last resort

    rows_padded = _round_up(rows, tm)
    n_rows = rows_padded // tm
    resident = (Hp == th)          # single hidden block covers all of H
    n_hidden = 1 if resident else Hp // th

    x2d = x.reshape(rows, D)
    if rows_padded != rows:
        x2d = jnp.pad(x2d, ((0, rows_padded - rows), (0, 0)))

    b1_2d = b1.reshape(1, H)
    if not resident and Hp != H:
        w1 = jnp.pad(w1, ((0, 0), (0, Hp - H)))
        b1_2d = jnp.pad(b1_2d, ((0, 0), (0, Hp - H)))
        w2 = jnp.pad(w2, ((0, Hp - H), (0, 0)))

    ln_params = jnp.stack([b2, gamma, beta]).astype(jnp.float32)  # (3, D)

    # Explicit VMEM budget sized from the chosen tiles (includes the (tm, th)
    # hidden intermediate), clamped below physical capacity.
    est = (_non_weight_bytes(tm, D, x_isz, o_isz)
           + _weight_block_bytes(D, (H if resident else th), tm, w_isz, h_isz))
    vmem_limit = min(max(int(est * 1.4) + (4 << 20), est + (2 << 20), 32 << 20),
                     vmem_cap - (2 << 20))

    if resident:
        grid = (n_rows,)
        in_specs = [
            pl.BlockSpec((tm, D), lambda i: (i, 0)),   # x rows
            pl.BlockSpec((D, H), lambda i: (0, 0)),    # w1 (resident)
            pl.BlockSpec((1, H), lambda i: (0, 0)),    # b1 (resident)
            pl.BlockSpec((H, D), lambda i: (0, 0)),    # w2 (resident)
            pl.BlockSpec((3, D), lambda i: (0, 0)),    # [b2; gamma; beta]
        ]
        out_specs = pl.BlockSpec((tm, D), lambda i: (i, 0))
        scratch_shapes = []
        kernel = functools.partial(_ffn_ln_resident_kernel, eps=eps, h_dtype=h_dtype)
        dim_sem = ("parallel",)
    else:
        nH = n_hidden

        def _serp(i, j):
            # Odd row tiles traverse the hidden axis in reverse so the weight
            # block at the row-tile boundary is unchanged (its DMA is skipped).
            parity = i % 2
            return j + parity * (nH - 1 - 2 * j)

        grid = (n_rows, nH)
        in_specs = [
            pl.BlockSpec((tm, D), lambda i, j: (i, 0)),           # x rows
            pl.BlockSpec((D, th), lambda i, j: (0, _serp(i, j))),  # w1 chunk
            pl.BlockSpec((1, th), lambda i, j: (0, _serp(i, j))),  # b1 chunk
            pl.BlockSpec((th, D), lambda i, j: (_serp(i, j), 0)),  # w2 chunk
            pl.BlockSpec((3, D), lambda i, j: (0, 0)),             # ln params
        ]
        out_specs = pl.BlockSpec((tm, D), lambda i, j: (i, 0))
        scratch_shapes = [pltpu.VMEM((tm, D), jnp.float32)]
        kernel = functools.partial(_ffn_ln_streamed_kernel, eps=eps, h_dtype=h_dtype)
        dim_sem = ("parallel", "arbitrary")

    out2d = pl.pallas_call(
        kernel,
        out_shape=jax.ShapeDtypeStruct((rows_padded, D), o_dtype),
        grid_spec=pltpu.PrefetchScalarGridSpec(
            num_scalar_prefetch=0,
            grid=grid,
            in_specs=in_specs,
            out_specs=out_specs,
            scratch_shapes=scratch_shapes,
        ),
        compiler_params=pltpu.CompilerParams(
            dimension_semantics=dim_sem,
            vmem_limit_bytes=int(vmem_limit)),
    )(x2d, w1, b1_2d, w2, ln_params)

    if rows_padded != rows:
        out2d = out2d[:rows]
    return out2d.reshape(B, S, D)


def init_params(key, dim_model, hidden):
    """Deterministic init mimicking torch.nn.Linear defaults."""
    k1, k2, k3, k4 = jax.random.split(key, 4)
    bound1 = 1.0 / jnp.sqrt(dim_model)
    bound2 = 1.0 / jnp.sqrt(hidden)
    # Stored already transposed so the kernel does x @ W (W: (in, out)).
    w1 = jax.random.uniform(k1, (dim_model, hidden), jnp.float32, -bound1, bound1)
    b1 = jax.random.uniform(k2, (hidden,), jnp.float32, -bound1, bound1)
    w2 = jax.random.uniform(k3, (hidden, dim_model), jnp.float32, -bound2, bound2)
    b2 = jax.random.uniform(k4, (dim_model,), jnp.float32, -bound2, bound2)
    gamma = jnp.ones((dim_model,), jnp.float32)   # LayerNorm weight
    beta = jnp.zeros((dim_model,), jnp.float32)   # LayerNorm bias
    return w1, b1, w2, b2, gamma, beta


def _reference(x, w1, b1, w2, b2, gamma, beta, eps=1e-5):
    h = jnp.maximum(x @ w1 + b1, 0.0)
    y = h @ w2 + b2
    mu = y.mean(-1, keepdims=True)
    var = ((y - mu) ** 2).mean(-1, keepdims=True)
    return (y - mu) / jnp.sqrt(var + eps) * gamma + beta


if __name__ == "__main__":
    dim_model, hidden = 64, 256

    key = jax.random.PRNGKey(0)
    kp, kx1, kx2, kx3 = jax.random.split(key, 4)
    params = init_params(kp, dim_model, hidden)

    # Case 1: resident fast path (single hidden block, 1-D row grid).
    x1 = jax.random.normal(kx1, (2, 8, dim_model), jnp.float32)
    out1 = jax.block_until_ready(position_wise_feed_forward(x1, *params))
    ref1 = _reference(x1, *params)
    assert out1.shape == x1.shape
    assert jnp.allclose(out1, ref1, atol=1e-5, rtol=1e-5)

    # Case 2: ragged rows + forced streaming (2 hidden chunks, 2 row tiles)
    # to exercise the accumulator init/finalize and serpentine index maps.
    x2 = jax.random.normal(kx2, (3, 7, dim_model), jnp.float32)
    out2 = jax.block_until_ready(position_wise_feed_forward(
        x2, *params, row_tile=16, hidden_tile=128))
    ref2 = _reference(x2, *params)
    assert out2.shape == x2.shape
    assert jnp.allclose(out2, ref2, atol=1e-5, rtol=1e-5)

    # Case 3: bf16 compute path (bf16 MXU operands, f32 accumulation/LayerNorm).
    x3 = jax.random.normal(kx3, (2, 8, dim_model), jnp.float32)
    out3 = jax.block_until_ready(position_wise_feed_forward(
        x3, *params, compute_dtype=jnp.bfloat16))
    ref3 = _reference(x3, *params)
    assert out3.shape == x3.shape
    assert jnp.allclose(out3.astype(jnp.float32), ref3, atol=5e-2, rtol=5e-2)

    print("KERNEL_OK")
</pallas_src>

<mosaic_0001>
module attributes {stable_mosaic.version = 11 : i64} {
  func.func @_ffn_ln_resident_kernel(%arg0: i32, %arg1: memref<16x64xf32, #tpu.memory_space<vmem>>, %arg2: memref<64x256xf32, #tpu.memory_space<vmem>>, %arg3: memref<1x256xf32, #tpu.memory_space<vmem>>, %arg4: memref<256x64xf32, #tpu.memory_space<vmem>>, %arg5: memref<3x64xf32, #tpu.memory_space<vmem>>, %arg6: memref<16x64xf32, #tpu.memory_space<vmem>>) attributes {dimension_semantics = [#tpu.dimension_semantics<parallel>], iteration_bounds = array<i64: 1>, scalar_prefetch = 0 : i64, scratch_operands = 0 : i64, tpu.core_type = #tpu.core_type<tc>, window_params = [{transform_indices = @transform_0, window_bounds = array<i64: 16, 64>}, {pipeline_mode = #tpu.pipeline_mode<synchronous>, transform_indices = @transform_1, window_bounds = array<i64: 64, 256>}, {pipeline_mode = #tpu.pipeline_mode<synchronous>, transform_indices = @transform_2, window_bounds = array<i64: 1, 256>}, {pipeline_mode = #tpu.pipeline_mode<synchronous>, transform_indices = @transform_3, window_bounds = array<i64: 256, 64>}, {pipeline_mode = #tpu.pipeline_mode<synchronous>, transform_indices = @transform_4, window_bounds = array<i64: 3, 64>}, {transform_indices = @transform_5, window_bounds = array<i64: 16, 64>}]} {
    %c0 = arith.constant 0 : index
    %c0_0 = arith.constant 0 : index
    %0 = vector.load %arg1[%c0, %c0_0] : memref<16x64xf32, #tpu.memory_space<vmem>>, vector<16x64xf32>
    %c0_1 = arith.constant 0 : index
    %c0_2 = arith.constant 0 : index
    %1 = vector.load %arg2[%c0_1, %c0_2] : memref<64x256xf32, #tpu.memory_space<vmem>>, vector<64x256xf32>
    %cst = arith.constant dense<0.000000e+00> : vector<16x256xf32>
    %2 = tpu.matmul %0, %1, %cst {dimension_numbers = #tpu.dot_dimension_numbers<[1], [0], [0], [1], [0, 0, 1, 1], [], []>} : vector<16x64xf32>, vector<64x256xf32>, vector<16x256xf32> -> vector<16x256xf32>
    %c0_3 = arith.constant 0 : index
    %c0_4 = arith.constant 0 : index
    %3 = vector.load %arg3[%c0_3, %c0_4] : memref<1x256xf32, #tpu.memory_space<vmem>>, vector<1x256xf32>
    %4 = vector.broadcast %3 : vector<1x256xf32> to vector<16x256xf32>
    %5 = arith.addf %2, %4 : vector<16x256xf32>
    %cst_5 = arith.constant 0.000000e+00 : f32
    %6 = vector.broadcast %cst_5 : f32 to vector<16x256xf32>
    %7 = arith.maximumf %5, %6 : vector<16x256xf32>
    %c0_6 = arith.constant 0 : index
    %c0_7 = arith.constant 0 : index
    %8 = vector.load %arg4[%c0_6, %c0_7] : memref<256x64xf32, #tpu.memory_space<vmem>>, vector<256x64xf32>
    %cst_8 = arith.constant dense<0.000000e+00> : vector<16x64xf32>
    %9 = tpu.matmul %7, %8, %cst_8 {dimension_numbers = #tpu.dot_dimension_numbers<[1], [0], [0], [1], [0, 0, 1, 1], [], []>} : vector<16x256xf32>, vector<256x64xf32>, vector<16x64xf32> -> vector<16x64xf32>
    %c0_9 = arith.constant 0 : index
    %c0_10 = arith.constant 0 : index
    %10 = vector.load %arg5[%c0_9, %c0_10] : memref<3x64xf32, #tpu.memory_space<vmem>>, vector<3x64xf32>
    %11 = vector.extract_strided_slice %10 {offsets = [0, 0], sizes = [1, 64], strides = [1, 1]} : vector<3x64xf32> to vector<1x64xf32>
    %12 = vector.extract_strided_slice %10 {offsets = [1, 0], sizes = [1, 64], strides = [1, 1]} : vector<3x64xf32> to vector<1x64xf32>
    %13 = vector.extract_strided_slice %10 {offsets = [2, 0], sizes = [1, 64], strides = [1, 1]} : vector<3x64xf32> to vector<1x64xf32>
    %14 = vector.broadcast %11 : vector<1x64xf32> to vector<16x64xf32>
    %15 = arith.addf %9, %14 : vector<16x64xf32>
    %cst_11 = arith.constant dense<0.000000e+00> : vector<16xf32>
    %16 = vector.multi_reduction <add>, %15, %cst_11 [1] : vector<16x64xf32> to vector<16xf32>
    %17 = vector.shape_cast %16 : vector<16xf32> to vector<16x1xf32>
    %cst_12 = arith.constant 6.400000e+01 : f32
    %18 = vector.broadcast %cst_12 : f32 to vector<16x1xf32>
    %19 = arith.divf %17, %18 : vector<16x1xf32>
    %20 = vector.broadcast %19 : vector<16x1xf32> to vector<16x64xf32>
    %21 = arith.subf %15, %20 : vector<16x64xf32>
    %22 = vector.broadcast %19 : vector<16x1xf32> to vector<16x64xf32>
    %23 = arith.subf %15, %22 : vector<16x64xf32>
    %24 = arith.mulf %21, %23 : vector<16x64xf32>
    %cst_13 = arith.constant dense<0.000000e+00> : vector<16xf32>
    %25 = vector.multi_reduction <add>, %24, %cst_13 [1] : vector<16x64xf32> to vector<16xf32>
    %26 = vector.shape_cast %25 : vector<16xf32> to vector<16x1xf32>
    %cst_14 = arith.constant 6.400000e+01 : f32
    %27 = vector.broadcast %cst_14 : f32 to vector<16x1xf32>
    %28 = arith.divf %26, %27 : vector<16x1xf32>
    %29 = vector.broadcast %19 : vector<16x1xf32> to vector<16x64xf32>
    %30 = arith.subf %15, %29 : vector<16x64xf32>
    %cst_15 = arith.constant 9.99999974E-6 : f32
    %31 = vector.broadcast %cst_15 : f32 to vector<16x1xf32>
    %32 = arith.addf %28, %31 : vector<16x1xf32>
    %33 = math.rsqrt %32 : vector<16x1xf32>
    %34 = vector.broadcast %33 : vector<16x1xf32> to vector<16x64xf32>
    %35 = arith.mulf %30, %34 : vector<16x64xf32>
    %36 = vector.broadcast %12 : vector<1x64xf32> to vector<16x64xf32>
    %37 = arith.mulf %35, %36 : vector<16x64xf32>
    %38 = vector.broadcast %13 : vector<1x64xf32> to vector<16x64xf32>
    %39 = arith.addf %37, %38 : vector<16x64xf32>
    %c0_16 = arith.constant 0 : index
    %c0_17 = arith.constant 0 : index
    %40 = vector.load %arg6[%c0_16, %c0_17] : memref<16x64xf32, #tpu.memory_space<vmem>>, vector<16x64xf32>
    tpu.vector_store %arg6[%c0_16, %c0_17], %39 {strides = array<i32>} : memref<16x64xf32, #tpu.memory_space<vmem>>, vector<16x64xf32>,
    return
  }
  func.func @transform_0(%arg0: i32) -> (i32, i32) {
    %c0_i32 = arith.constant 0 : i32
    %c0_i32_0 = arith.constant 0 : i32
    return %arg0, %c0_i32 : i32, i32
  }
  func.func @transform_1(%arg0: i32) -> (i32, i32) {
    %c0_i32 = arith.constant 0 : i32
    %c0_i32_0 = arith.constant 0 : i32
    %c0_i32_1 = arith.constant 0 : i32
    return %c0_i32, %c0_i32_0 : i32, i32
  }
  func.func @transform_2(%arg0: i32) -> (i32, i32) {
    %c0_i32 = arith.constant 0 : i32
    %c0_i32_0 = arith.constant 0 : i32
    %c0_i32_1 = arith.constant 0 : i32
    return %c0_i32, %c0_i32_0 : i32, i32
  }
  func.func @transform_3(%arg0: i32) -> (i32, i32) {
    %c0_i32 = arith.constant 0 : i32
    %c0_i32_0 = arith.constant 0 : i32
    %c0_i32_1 = arith.constant 0 : i32
    return %c0_i32, %c0_i32_0 : i32, i32
  }
  func.func @transform_4(%arg0: i32) -> (i32, i32) {
    %c0_i32 = arith.constant 0 : i32
    %c0_i32_0 = arith.constant 0 : i32
    %c0_i32_1 = arith.constant 0 : i32
    return %c0_i32, %c0_i32_0 : i32, i32
  }
  func.func @transform_5(%arg0: i32) -> (i32, i32) {
    %c0_i32 = arith.constant 0 : i32
    %c0_i32_0 = arith.constant 0 : i32
    return %arg0, %c0_i32 : i32, i32
  }
}

</mosaic_0001>

<llo_original>
// kernel: tpu_custom_call.1
$region0: #{tpu_custom_call.1}
  #allocation0 [shape = 'u32[]', space=smem, size = 0x4, offset = 0x4, fixed_abs, tag = 'smem constant byte address 0x4 - core index']
  #allocation1 [shape = 'u32[72,128]{1,0:T(1,128)}', space=vmem, size = 0x9000, scoped, tag = 'internal scratch']
  %s0 = inlined_call_operand.vmem [shape: f32[16,64], index: 0, kind: input, shape index: {}]
  %s1 = inlined_call_operand.vmem [shape: f32[64,256], index: 1, kind: input, shape index: {}]
  %s2 = inlined_call_operand.vmem [shape: f32[1,256], index: 2, kind: input, shape index: {}]
  %s3 = inlined_call_operand.vmem [shape: f32[256,64], index: 3, kind: input, shape index: {}]
  %s4 = inlined_call_operand.vmem [shape: f32[3,64], index: 4, kind: input, shape index: {}]
  %s5 = inlined_call_operand.hbm [shape: f32[16,64], index: 5, kind: output, shape index: {}]
  %s6 = sld [smem:[#allocation0]]
  $region30: #{tpu_custom_call.1} parent=0
    _
  %s8 = ssub.s32 1, %s6
  %s9 = scalar_select 0, %s8, %s6
  $region1: #{tpu_custom_call.1} parent=0
    #allocation2 [shape = 'u8[8192]{0}', space=vmem, size = 0x2000, scoped, tag = 'output window, operand 0, single buffered']
    #allocation3 [shape = 's32[1]{0}', space=sflag, size = 0x4, scoped, tag = 'scoped memory for tpu_custom_call.1']
    %10 = vsyncpa [#allocation3], 0
    // Predicated region
    $region2: #{tpu_custom_call.1} parent=1 // pred_check
      _
    $region3: #{tpu_custom_call.1} parent=1 // pred_check_branch
      %12 = sbr.rel (0) target = $region5
    $region4: #{tpu_custom_call.1} parent=1 // pred_region
      _
    $region5: #{tpu_custom_call.1} parent=1 // pred_fallthru
      _
    // Predicated region
    $region6: #{tpu_custom_call.1} parent=1 // pred_check
      _
    $region7: #{tpu_custom_call.1} parent=1 // pred_check_branch
      %14 = sbr.rel (0) target = $region9
    $region8: #{tpu_custom_call.1} parent=1 // pred_region
      _
    $region9: #{tpu_custom_call.1} parent=1 // pred_fallthru
      _
    // Predicated region
    $region10: #{tpu_custom_call.1} parent=1 // pred_check
      _
    $region11: #{tpu_custom_call.1} parent=1 // pred_check_branch
      %16 = sbr.rel (0) target = $region13
    $region12: #{tpu_custom_call.1} parent=1 // pred_region
      _
    $region13: #{tpu_custom_call.1} parent=1 // pred_fallthru
      _
    // Predicated region
    $region14: #{tpu_custom_call.1} parent=1 // pred_check
      _
    $region15: #{tpu_custom_call.1} parent=1 // pred_check_branch
      %18 = sbr.rel (0) target = $region17
    $region16: #{tpu_custom_call.1} parent=1 // pred_region
      _
    $region17: #{tpu_custom_call.1} parent=1 // pred_fallthru
      _
    // Predicated region
    $region18: #{tpu_custom_call.1} parent=1 // pred_check
      _
    $region19: #{tpu_custom_call.1} parent=1 // pred_check_branch
      %20 = sbr.rel (0) target = $region21
    $region20: #{tpu_custom_call.1} parent=1 // pred_region
      _
    $region21: #{tpu_custom_call.1} parent=1 // pred_fallthru
      _
    %v21 = vld [vmem:[%s0] sm:$0xff]
    %v22 = vld [vmem:[%s0 + $0x8] sm:$0xff]
    %v23 = vld [vmem:[%s1] sm:$0xff]
    %v24 = vld [vmem:[%s1 + $0x8] sm:$0xff]
    %v25 = vld [vmem:[%s1 + $0x10] sm:$0xff]
    %v26 = vld [vmem:[%s1 + $0x18] sm:$0xff]
    %v27 = vld [vmem:[%s1 + $0x20] sm:$0xff]
    %v28 = vld [vmem:[%s1 + $0x28] sm:$0xff]
    %v29 = vld [vmem:[%s1 + $0x30] sm:$0xff]
    %v30 = vld [vmem:[%s1 + $0x38] sm:$0xff]
    %v31 = vld [vmem:[%s1 + $0x40] sm:$0xff]
    %v32 = vld [vmem:[%s1 + $0x48] sm:$0xff]
    %v33 = vld [vmem:[%s1 + $0x50] sm:$0xff]
    %v34 = vld [vmem:[%s1 + $0x58] sm:$0xff]
    %v35 = vld [vmem:[%s1 + $0x60] sm:$0xff]
    %v36 = vld [vmem:[%s1 + $0x68] sm:$0xff]
    %v37 = vld [vmem:[%s1 + $0x70] sm:$0xff]
    %v38 = vld [vmem:[%s1 + $0x78] sm:$0xff]
    %v39 = vld [vmem:[%s2] sm:$0x3]
    %v41 = vperm.slane %v39, 0
    %v42 = vperm.slane %v39, 1
    %vm45 = vcmask 523264
    %v47 = vsel %vm45, %v21, 0
    %v50 = vsel %vm45, %v22, 0
    %52 = vmatpush.msra.mxu0 0.0
    %53 = vmatpush.msra.mxu0 0.0
    %54 = vmatpush.msra.mxu0 0.0
    %55 = vmatpush.msra.mxu0 0.0
    %56 = vmatpush.msra.mxu0 0.0
    %57 = vmatpush.msra.mxu0 0.0
    %58 = vmatpush.msra.mxu0 0.0
    %59 = vmatpush.msra.mxu0 0.0
    %60 = vmatpush.msra.mxu0 %v37
    %61 = vmatpush.msra.mxu0 %v35
    %62 = vmatpush.msra.mxu0 %v33
    %63 = vmatpush.msra.mxu0 %v31
    %64 = vmatpush.msra.mxu0 %v29
    %65 = vmatpush.msra.mxu0 %v27
    %66 = vmatpush.msra.mxu0 %v25
    %67 = vmatpush.msra.mxu0 %v23
    %68 = vmatmul.f32.gmra.mxu0 %v47
    %v69 = vpop.f32.mrf.mxu0
    %v70 = vadd.f32 %v41, %v69
    %71 = vmatmul.f32.gmra.mxu0 %v50
    %v72 = vpop.f32.mrf.mxu0
    %v73 = vadd.f32 %v41, %v72
    %74 = vdwg.mxu0
    %75 = vmatpush.msra.mxu0 0.0
    %76 = vmatpush.msra.mxu0 0.0
    %77 = vmatpush.msra.mxu0 0.0
    %78 = vmatpush.msra.mxu0 0.0
    %79 = vmatpush.msra.mxu0 0.0
    %80 = vmatpush.msra.mxu0 0.0
    %81 = vmatpush.msra.mxu0 0.0
    %82 = vmatpush.msra.mxu0 0.0
    %83 = vmatpush.msra.mxu0 %v38
    %84 = vmatpush.msra.mxu0 %v36
    %85 = vmatpush.msra.mxu0 %v34
    %86 = vmatpush.msra.mxu0 %v32
    %87 = vmatpush.msra.mxu0 %v30
    %88 = vmatpush.msra.mxu0 %v28
    %89 = vmatpush.msra.mxu0 %v26
    %90 = vmatpush.msra.mxu0 %v24
    %91 = vmatmul.f32.gmra.mxu0 %v47
    %v92 = vpop.f32.mrf.mxu0
    %v93 = vadd.f32 %v42, %v92
    %94 = vmatmul.f32.gmra.mxu0 %v50
    %v95 = vpop.f32.mrf.mxu0
    %v96 = vadd.f32 %v42, %v95
    %97 = vdwg.mxu0
    %v98 = vmax.f32 %v70, 0.0
    %v99 = vmax.f32 %v93, 0.0
    %v100 = vmax.f32 %v73, 0.0
    %v101 = vmax.f32 %v96, 0.0
    %v102 = vld [vmem:[%s3] sm:$0xff]
    %v103 = vld [vmem:[%s3 + $0x8] sm:$0xff]
    %v104 = vld [vmem:[%s3 + $0x10] sm:$0xff]
    %v105 = vld [vmem:[%s3 + $0x18] sm:$0xff]
    %v106 = vld [vmem:[%s3 + $0x20] sm:$0xff]
    %v107 = vld [vmem:[%s3 + $0x28] sm:$0xff]
    %v108 = vld [vmem:[%s3 + $0x30] sm:$0xff]
    %v109 = vld [vmem:[%s3 + $0x38] sm:$0xff]
    %v110 = vld [vmem:[%s3 + $0x40] sm:$0xff]
    %v111 = vld [vmem:[%s3 + $0x48] sm:$0xff]
    %v112 = vld [vmem:[%s3 + $0x50] sm:$0xff]
    %v113 = vld [vmem:[%s3 + $0x58] sm:$0xff]
    %v114 = vld [vmem:[%s3 + $0x60] sm:$0xff]
    %v115 = vld [vmem:[%s3 + $0x68] sm:$0xff]
    %v116 = vld [vmem:[%s3 + $0x70] sm:$0xff]
    %v117 = vld [vmem:[%s3 + $0x78] sm:$0xff]
    %v118 = vld [vmem:[%s3 + $0x80] sm:$0xff]
    %v119 = vld [vmem:[%s3 + $0x88] sm:$0xff]
    %v120 = vld [vmem:[%s3 + $0x90] sm:$0xff]
    %v121 = vld [vmem:[%s3 + $0x98] sm:$0xff]
    %v122 = vld [vmem:[%s3 + $0xa0] sm:$0xff]
    %v123 = vld [vmem:[%s3 + $0xa8] sm:$0xff]
    %v124 = vld [vmem:[%s3 + $0xb0] sm:$0xff]
    %v125 = vld [vmem:[%s3 + $0xb8] sm:$0xff]
    %v126 = vld [vmem:[%s3 + $0xc0] sm:$0xff]
    %v127 = vld [vmem:[%s3 + $0xc8] sm:$0xff]
    %v128 = vld [vmem:[%s3 + $0xd0] sm:$0xff]
    %v129 = vld [vmem:[%s3 + $0xd8] sm:$0xff]
    %v130 = vld [vmem:[%s3 + $0xe0] sm:$0xff]
    %v131 = vld [vmem:[%s3 + $0xe8] sm:$0xff]
    %v132 = vld [vmem:[%s3 + $0xf0] sm:$0xff]
    %v133 = vld [vmem:[%s3 + $0xf8] sm:$0xff]
    %v134 = vld [vmem:[%s4] sm:$0x7]
    %v135 = vperm.slane %v134, 0
    %136 = vmatpush.msra.mxu0 %v117
    %137 = vmatpush.msra.mxu0 %v116
    %138 = vmatpush.msra.mxu0 %v115
    %139 = vmatpush.msra.mxu0 %v114
    %140 = vmatpush.msra.mxu0 %v113
    %141 = vmatpush.msra.mxu0 %v112
    %142 = vmatpush.msra.mxu0 %v111
    %143 = vmatpush.msra.mxu0 %v110
    %144 = vmatpush.msra.mxu0 %v109
    %145 = vmatpush.msra.mxu0 %v108
    %146 = vmatpush.msra.mxu0 %v107
    %147 = vmatpush.msra.mxu0 %v106
    %148 = vmatpush.msra.mxu0 %v105
    %149 = vmatpush.msra.mxu0 %v104
    %150 = vmatpush.msra.mxu0 %v103
    %151 = vmatpush.msra.mxu0 %v102
    %152 = vmatmul.f32.gmra.mxu0 %v98
    %v153 = vpop.f32.mrf.mxu0
    %v154 = vadd.f32 %v135, %v153
    %155 = vmatmul.f32.gmra.mxu0 %v100
    %v156 = vpop.f32.mrf.mxu0
    %v157 = vadd.f32 %v135, %v156
    %158 = vdwg.mxu0
    %159 = vmatpush.msra.mxu0 %v133
    %160 = vmatpush.msra.mxu0 %v132
    %161 = vmatpush.msra.mxu0 %v131
    %162 = vmatpush.msra.mxu0 %v130
    %163 = vmatpush.msra.mxu0 %v129
    %164 = vmatpush.msra.mxu0 %v128
    %165 = vmatpush.msra.mxu0 %v127
    %166 = vmatpush.msra.mxu0 %v126
    %167 = vmatpush.msra.mxu0 %v125
    %168 = vmatpush.msra.mxu0 %v124
    %169 = vmatpush.msra.mxu0 %v123
    %170 = vmatpush.msra.mxu0 %v122
    %171 = vmatpush.msra.mxu0 %v121
    %172 = vmatpush.msra.mxu0 %v120
    %173 = vmatpush.msra.mxu0 %v119
    %174 = vmatpush.msra.mxu0 %v118
    %175 = vmatmul.f32.gmra.mxu0 %v99
    %v176 = vpop.f32.mrf.mxu0
    %v177 = vadd.f32 %v154, %v176
    %178 = vmatmul.f32.gmra.mxu0 %v101
    %v179 = vpop.f32.mrf.mxu0
    %v180 = vadd.f32 %v157, %v179
    %181 = vdwg.mxu0
    %v182 = vsel %vm45, %v177, 0.0
    %183 = vadd.xlane.f32.xlu0 %v182
    %v184 = vpop.xlane.xlu0 %183
    %v185 = vsel %vm45, %v180, 0.0
    %186 = vadd.xlane.f32.xlu0 %v185
    %v187 = vpop.xlane.xlu0 %186
    %v188 = vrcp.pop 64.0
    %v189 = vmul.f32 64.0, %v188
    %v190 = vsub.f32 1.0, %v189
    %v191 = vmul.f32 %v188, %v190
    %v192 = vadd.f32 %v188, %v191
    %vm193 = vweird.f32 %v188
    %v194 = vsel %vm193, %v188, %v192
    %v195 = vmul.f32 %v184, %v194
    %v196 = vmul.f32 %v187, %v194
    %v197 = vsub.f32 %v177, %v195
    %v198 = vsub.f32 %v180, %v196
    %v199 = vmul.f32 %v197, %v197
    %v200 = vmul.f32 %v198, %v198
    %v201 = vsel %vm45, %v199, 0.0
    %202 = vadd.xlane.f32.xlu0 %v201
    %v203 = vpop.xlane.xlu0 %202
    %v204 = vsel %vm45, %v200, 0.0
    %205 = vadd.xlane.f32.xlu0 %v204
    %v206 = vpop.xlane.xlu0 %205
    %v207 = vmul.f32 %v203, %v194
    %v208 = vmul.f32 %v206, %v194
    %v209 = vadd.f32 %v207, 1e-05
    %v210 = vadd.f32 %v208, 1e-05
    %v211 = vrsqrt.pop %v209
    %v212 = vmul.f32 %v211, %v209
    %v213 = vmul.f32 %v212, %v211
    %v214 = vmul.f32 0.5, %v213
    %v215 = vsub.f32 1.5, %v214
    %v216 = vmul.f32 %v211, %v215
    %vm217 = vweird.f32 %v209
    %vm218 = vweird.f32 %v211
    %vm219 = vmor %vm217, %vm218
    %v220 = vsel %vm219, %v211, %v216
    %v221 = vrsqrt.pop %v210
    %v222 = vmul.f32 %v221, %v210
    %v223 = vmul.f32 %v222, %v221
    %v224 = vmul.f32 0.5, %v223
    %v225 = vsub.f32 1.5, %v224
    %v226 = vmul.f32 %v221, %v225
    %vm227 = vweird.f32 %v210
    %vm228 = vweird.f32 %v221
    %vm229 = vmor %vm227, %vm228
    %v230 = vsel %vm229, %v221, %v226
    %v231 = vmul.f32 %v197, %v220
    %v232 = vmul.f32 %v198, %v230
    %v233 = vperm.slane %v134, 1
    %v234 = vmul.f32 %v231, %v233
    %v235 = vmul.f32 %v232, %v233
    %v236 = vperm.slane %v134, 2
    %v237 = vadd.f32 %v234, %v236
    %v238 = vadd.f32 %v235, %v236
    %239 = vst.msk [vmem:[#allocation2] sm:$0xff] %vm45, %v237
    %240 = vst.msk [vmem:[#allocation2 + $0x8] sm:$0xff] %vm45, %v238
    // Predicated region
    $region22: #{tpu_custom_call.1} parent=1 // pred_check
      _
    $region23: #{tpu_custom_call.1} parent=1 // pred_check_branch
      %242 = sbr.rel (0) target = $region25
    $region24: #{tpu_custom_call.1} parent=1 // pred_region
      %244 = vsyncadd [#allocation3], 0
      %s245 = sshll.u32 [#allocation2], 4
      %s246 = int_to_ptr.vmem [resolvable:$true] %s245
      %s247 = sshll.u32 %s5, 4
      %s248 = int_to_ptr.hbm [resolvable:$true] %s247
      %253 = dma.vmem_to_hbm [thread:$0]  %s246, 256, %s248, [#allocation3], 128, 128, 8
    $region25: #{tpu_custom_call.1} parent=1 // pred_fallthru
      _
    // Predicated region
    $region26: #{tpu_custom_call.1} parent=1 // pred_check
      _
    $region27: #{tpu_custom_call.1} parent=1 // pred_check_branch
      %255 = sbr.rel (0) target = $region29
    $region28: #{tpu_custom_call.1} parent=1 // pred_region
      %257 = dma.done [#allocation3], 256
    $region29: #{tpu_custom_call.1} parent=1 // pred_fallthru
      _
    %258 = vsyncpa [#allocation3], 1

</llo_original>
